<compile_context>
chip_gen: v6e
topology: v6e:2x2x1
jax: 0.10.0
libtpu: 0.0.40
codegen_flags: <defaults>
</compile_context>

<pallas_src>
import jax
import jax.numpy as jnp
from jax.experimental import pallas as pl
from jax.experimental.pallas import tpu as pltpu

NUM_CLASSES = 23
LANE = 128
MAX_ROW_TILE = 512  # 23 * 512 * 128 * 4 B = 5.75 MiB output slab; x2 buffers ~11.5 MiB


def _round_up(x: int, m: int) -> int:
    return ((x + m - 1) // m) * m


def _one_hot_kernel(t_ref, out_ref):
    # t_ref:   (TR, 128) int32 labels (padding lanes = NUM_CLASSES -> all-zero one-hot)
    # out_ref: (NUM_CLASSES, TR, 128) float32 -- all channels for this row tile
    t = t_ref[...]
    t = jnp.where(t == -1, 1, t)  # -1 -> 1 remap folded into the kernel (VPU, free: DMA-bound)
    for c in range(NUM_CLASSES):  # unrolled: one VPU compare + full-lane stores per channel
        out_ref[c] = (t == c).astype(jnp.float32)


def _choose_row_tile(R: int) -> int:
    """Per-step row tile.

    Block rows must be a multiple of 8 or equal the full row count R. Keep the
    double-buffered output slab within the smallest default scoped-VMEM limit
    (v5e: 16 MiB) and aim for >= 2 row tiles when the image is big enough so
    both of v7x's TensorCores get work.
    """
    if R <= 8:
        return R  # single tile; block == full array dim (any R allowed)
    if R <= 2 * MAX_ROW_TILE:
        return _round_up(pl.cdiv(R, 2), 8)  # ~2 tiles, rows a multiple of 8
    return MAX_ROW_TILE


@jax.jit
def _build_prediction(target_image: jax.Array) -> jax.Array:
    """One-hot (1, 23, H, W) float32 prediction, computed with a Pallas kernel."""
    H, W = target_image.shape
    N = H * W

    t = target_image.astype(jnp.int32)  # no-op if already int32

    # Lane-dense packing: flatten HW (row-major, so the final (C, H, W) reshape is
    # free) into (R, 128) so every output store is a full 128-lane vst. Only the
    # ragged last lane row (<= 127 elements) is padded, with NUM_CLASSES, which
    # never matches any class and one-hots to zero.
    R = pl.cdiv(N, LANE)
    N_pad = R * LANE
    t_flat = t.reshape(-1)
    if N_pad != N:
        t_flat = jnp.pad(t_flat, (0, N_pad - N), constant_values=NUM_CLASSES)
    t_tiles = t_flat.reshape(R, LANE)

    TR = _choose_row_tile(R)
    grid = (pl.cdiv(R, TR),)  # ragged last tile OK: OOB reads unused, OOB writes dropped

    prediction_flat = pl.pallas_call(
        _one_hot_kernel,
        out_shape=jax.ShapeDtypeStruct((NUM_CLASSES, R, LANE), jnp.float32),
        grid=grid,
        in_specs=[pl.BlockSpec((TR, LANE), lambda h: (h, 0))],
        out_specs=pl.BlockSpec((NUM_CLASSES, TR, LANE), lambda h: (0, h, 0)),
        compiler_params=pltpu.CompilerParams(
            dimension_semantics=("parallel",)),
        cost_estimate=pl.CostEstimate(
            flops=NUM_CLASSES * N_pad,
            transcendentals=0,
            bytes_accessed=4 * (N_pad + NUM_CLASSES * N_pad)),
    )(t_tiles)

    # Undo lane packing. When H*W % 128 == 0 the slice is an identity XLA elides.
    prediction = prediction_flat.reshape(NUM_CLASSES, N_pad)[:, :N]
    return prediction.reshape(NUM_CLASSES, H, W)[None]


def make_dummy_segmentation_model(target_image: jax.Array):
    """Mirrors DummySegmentationModel: precompute prediction once; forward ignores x."""
    # TODO(synk): PyTorch mutates target_image in place (-1 -> 1); the JAX version
    # leaves the caller's array untouched (semantic-only divergence).
    # Note: labels outside {-1} U [0, 22] silently one-hot to all zeros here, whereas
    # torch.scatter would error / write out of bounds.
    prediction = _build_prediction(target_image)

    def forward(x):
        # forward returns self.prediction.float(); x is unused (as in the module).
        del x
        return prediction

    return forward


def _reference_prediction(target_image: jax.Array) -> jax.Array:
    t_fixed = jnp.where(target_image == -1, 1, target_image)
    ref = jax.nn.one_hot(t_fixed, NUM_CLASSES, dtype=jnp.float32)  # (H, W, C)
    return jnp.transpose(ref, (2, 0, 1))[None]                     # (1, C, H, W)


if __name__ == "__main__":
    key = jax.random.PRNGKey(0)
    k_t, k_t2, k_x = jax.random.split(key, 3)

    # --- Main check: H*W % 128 == 0 (no padding, slice is a no-op) ---
    H, W = 16, 16
    target_image = jax.random.randint(
        k_t, (H, W), minval=-1, maxval=NUM_CLASSES, dtype=jnp.int32)
    x = jax.random.normal(k_x, (2, 3, H, W), dtype=jnp.float32)  # ignored by the model

    forward = make_dummy_segmentation_model(target_image)
    out = jax.block_until_ready(forward(x))

    ref = _reference_prediction(target_image)
    assert out.shape == (1, NUM_CLASSES, H, W), out.shape
    assert out.dtype == jnp.float32, out.dtype
    assert bool(jnp.all(out == ref)), "mismatch vs reference one-hot (16x16)"

    # --- Secondary check: H*W not a multiple of 128 (exercises the pad/slice path) ---
    H2, W2 = 15, 17
    target_image2 = jax.random.randint(
        k_t2, (H2, W2), minval=-1, maxval=NUM_CLASSES, dtype=jnp.int32)
    out2 = jax.block_until_ready(make_dummy_segmentation_model(target_image2)(x))
    ref2 = _reference_prediction(target_image2)
    assert out2.shape == (1, NUM_CLASSES, H2, W2), out2.shape
    assert bool(jnp.all(out2 == ref2)), "mismatch vs reference one-hot (15x17)"

    print("KERNEL_OK")
</pallas_src>

<mosaic_0001>
module attributes {stable_mosaic.version = 11 : i64} {
  func.func @_one_hot_kernel(%arg0: i32, %arg1: memref<2x128xi32, #tpu.memory_space<vmem>>, %arg2: memref<23x2x128xf32, #tpu.memory_space<vmem>>) attributes {dimension_semantics = [#tpu.dimension_semantics<parallel>], iteration_bounds = array<i64: 1>, scalar_prefetch = 0 : i64, scratch_operands = 0 : i64, tpu.core_type = #tpu.core_type<tc>, window_params = [{transform_indices = @transform_0, window_bounds = array<i64: 2, 128>}, {transform_indices = @transform_1, window_bounds = array<i64: 23, 2, 128>}]} {
    %c0 = arith.constant 0 : index
    %c0_0 = arith.constant 0 : index
    %0 = vector.load %arg1[%c0, %c0_0] : memref<2x128xi32, #tpu.memory_space<vmem>>, vector<2x128xi32>
    %c-1_i32 = arith.constant -1 : i32
    %1 = vector.broadcast %c-1_i32 : i32 to vector<2x128xi32>
    %2 = arith.cmpi eq, %0, %1 : vector<2x128xi32>
    %c1_i32 = arith.constant 1 : i32
    %3 = vector.broadcast %c1_i32 : i32 to vector<2x128xi32>
    %4 = arith.select %2, %3, %0 : vector<2x128xi1>, vector<2x128xi32>
    %c0_i32 = arith.constant 0 : i32
    %5 = vector.broadcast %c0_i32 : i32 to vector<2x128xi32>
    %6 = arith.cmpi eq, %4, %5 : vector<2x128xi32>
    %7 = arith.extui %6 : vector<2x128xi1> to vector<2x128xi32>
    %8 = arith.sitofp %7 : vector<2x128xi32> to vector<2x128xf32>
    %c0_1 = arith.constant 0 : index
    %c0_2 = arith.constant 0 : index
    %c0_3 = arith.constant 0 : index
    %9 = vector.load %arg2[%c0_1, %c0_2, %c0_3] : memref<23x2x128xf32, #tpu.memory_space<vmem>>, vector<1x2x128xf32>
    %10 = vector.shape_cast %9 : vector<1x2x128xf32> to vector<2x128xf32>
    %11 = vector.shape_cast %8 : vector<2x128xf32> to vector<1x2x128xf32>
    tpu.vector_store %arg2[%c0_1, %c0_2, %c0_3], %11 {strides = array<i32>} : memref<23x2x128xf32, #tpu.memory_space<vmem>>, vector<1x2x128xf32>,
    %c1_i32_4 = arith.constant 1 : i32
    %12 = vector.broadcast %c1_i32_4 : i32 to vector<2x128xi32>
    %13 = arith.cmpi eq, %4, %12 : vector<2x128xi32>
    %14 = arith.extui %13 : vector<2x128xi1> to vector<2x128xi32>
    %15 = arith.sitofp %14 : vector<2x128xi32> to vector<2x128xf32>
    %c1 = arith.constant 1 : index
    %c0_5 = arith.constant 0 : index
    %c0_6 = arith.constant 0 : index
    %16 = vector.load %arg2[%c1, %c0_5, %c0_6] : memref<23x2x128xf32, #tpu.memory_space<vmem>>, vector<1x2x128xf32>
    %17 = vector.shape_cast %16 : vector<1x2x128xf32> to vector<2x128xf32>
    %18 = vector.shape_cast %15 : vector<2x128xf32> to vector<1x2x128xf32>
    tpu.vector_store %arg2[%c1, %c0_5, %c0_6], %18 {strides = array<i32>} : memref<23x2x128xf32, #tpu.memory_space<vmem>>, vector<1x2x128xf32>,
    %c2_i32 = arith.constant 2 : i32
    %19 = vector.broadcast %c2_i32 : i32 to vector<2x128xi32>
    %20 = arith.cmpi eq, %4, %19 : vector<2x128xi32>
    %21 = arith.extui %20 : vector<2x128xi1> to vector<2x128xi32>
    %22 = arith.sitofp %21 : vector<2x128xi32> to vector<2x128xf32>
    %c2 = arith.constant 2 : index
    %c0_7 = arith.constant 0 : index
    %c0_8 = arith.constant 0 : index
    %23 = vector.load %arg2[%c2, %c0_7, %c0_8] : memref<23x2x128xf32, #tpu.memory_space<vmem>>, vector<1x2x128xf32>
    %24 = vector.shape_cast %23 : vector<1x2x128xf32> to vector<2x128xf32>
    %25 = vector.shape_cast %22 : vector<2x128xf32> to vector<1x2x128xf32>
    tpu.vector_store %arg2[%c2, %c0_7, %c0_8], %25 {strides = array<i32>} : memref<23x2x128xf32, #tpu.memory_space<vmem>>, vector<1x2x128xf32>,
    %c3_i32 = arith.constant 3 : i32
    %26 = vector.broadcast %c3_i32 : i32 to vector<2x128xi32>
    %27 = arith.cmpi eq, %4, %26 : vector<2x128xi32>
    %28 = arith.extui %27 : vector<2x128xi1> to vector<2x128xi32>
    %29 = arith.sitofp %28 : vector<2x128xi32> to vector<2x128xf32>
    %c3 = arith.constant 3 : index
    %c0_9 = arith.constant 0 : index
    %c0_10 = arith.constant 0 : index
    %30 = vector.load %arg2[%c3, %c0_9, %c0_10] : memref<23x2x128xf32, #tpu.memory_space<vmem>>, vector<1x2x128xf32>
    %31 = vector.shape_cast %30 : vector<1x2x128xf32> to vector<2x128xf32>
    %32 = vector.shape_cast %29 : vector<2x128xf32> to vector<1x2x128xf32>
    tpu.vector_store %arg2[%c3, %c0_9, %c0_10], %32 {strides = array<i32>} : memref<23x2x128xf32, #tpu.memory_space<vmem>>, vector<1x2x128xf32>,
    %c4_i32 = arith.constant 4 : i32
    %33 = vector.broadcast %c4_i32 : i32 to vector<2x128xi32>
    %34 = arith.cmpi eq, %4, %33 : vector<2x128xi32>
    %35 = arith.extui %34 : vector<2x128xi1> to vector<2x128xi32>
    %36 = arith.sitofp %35 : vector<2x128xi32> to vector<2x128xf32>
    %c4 = arith.constant 4 : index
    %c0_11 = arith.constant 0 : index
    %c0_12 = arith.constant 0 : index
    %37 = vector.load %arg2[%c4, %c0_11, %c0_12] : memref<23x2x128xf32, #tpu.memory_space<vmem>>, vector<1x2x128xf32>
    %38 = vector.shape_cast %37 : vector<1x2x128xf32> to vector<2x128xf32>
    %39 = vector.shape_cast %36 : vector<2x128xf32> to vector<1x2x128xf32>
    tpu.vector_store %arg2[%c4, %c0_11, %c0_12], %39 {strides = array<i32>} : memref<23x2x128xf32, #tpu.memory_space<vmem>>, vector<1x2x128xf32>,
    %c5_i32 = arith.constant 5 : i32
    %40 = vector.broadcast %c5_i32 : i32 to vector<2x128xi32>
    %41 = arith.cmpi eq, %4, %40 : vector<2x128xi32>
    %42 = arith.extui %41 : vector<2x128xi1> to vector<2x128xi32>
    %43 = arith.sitofp %42 : vector<2x128xi32> to vector<2x128xf32>
    %c5 = arith.constant 5 : index
    %c0_13 = arith.constant 0 : index
    %c0_14 = arith.constant 0 : index
    %44 = vector.load %arg2[%c5, %c0_13, %c0_14] : memref<23x2x128xf32, #tpu.memory_space<vmem>>, vector<1x2x128xf32>
    %45 = vector.shape_cast %44 : vector<1x2x128xf32> to vector<2x128xf32>
    %46 = vector.shape_cast %43 : vector<2x128xf32> to vector<1x2x128xf32>
    tpu.vector_store %arg2[%c5, %c0_13, %c0_14], %46 {strides = array<i32>} : memref<23x2x128xf32, #tpu.memory_space<vmem>>, vector<1x2x128xf32>,
    %c6_i32 = arith.constant 6 : i32
    %47 = vector.broadcast %c6_i32 : i32 to vector<2x128xi32>
    %48 = arith.cmpi eq, %4, %47 : vector<2x128xi32>
    %49 = arith.extui %48 : vector<2x128xi1> to vector<2x128xi32>
    %50 = arith.sitofp %49 : vector<2x128xi32> to vector<2x128xf32>
    %c6 = arith.constant 6 : index
    %c0_15 = arith.constant 0 : index
    %c0_16 = arith.constant 0 : index
    %51 = vector.load %arg2[%c6, %c0_15, %c0_16] : memref<23x2x128xf32, #tpu.memory_space<vmem>>, vector<1x2x128xf32>
    %52 = vector.shape_cast %51 : vector<1x2x128xf32> to vector<2x128xf32>
    %53 = vector.shape_cast %50 : vector<2x128xf32> to vector<1x2x128xf32>
    tpu.vector_store %arg2[%c6, %c0_15, %c0_16], %53 {strides = array<i32>} : memref<23x2x128xf32, #tpu.memory_space<vmem>>, vector<1x2x128xf32>,
    %c7_i32 = arith.constant 7 : i32
    %54 = vector.broadcast %c7_i32 : i32 to vector<2x128xi32>
    %55 = arith.cmpi eq, %4, %54 : vector<2x128xi32>
    %56 = arith.extui %55 : vector<2x128xi1> to vector<2x128xi32>
    %57 = arith.sitofp %56 : vector<2x128xi32> to vector<2x128xf32>
    %c7 = arith.constant 7 : index
    %c0_17 = arith.constant 0 : index
    %c0_18 = arith.constant 0 : index
    %58 = vector.load %arg2[%c7, %c0_17, %c0_18] : memref<23x2x128xf32, #tpu.memory_space<vmem>>, vector<1x2x128xf32>
    %59 = vector.shape_cast %58 : vector<1x2x128xf32> to vector<2x128xf32>
    %60 = vector.shape_cast %57 : vector<2x128xf32> to vector<1x2x128xf32>
    tpu.vector_store %arg2[%c7, %c0_17, %c0_18], %60 {strides = array<i32>} : memref<23x2x128xf32, #tpu.memory_space<vmem>>, vector<1x2x128xf32>,
    %c8_i32 = arith.constant 8 : i32
    %61 = vector.broadcast %c8_i32 : i32 to vector<2x128xi32>
    %62 = arith.cmpi eq, %4, %61 : vector<2x128xi32>
    %63 = arith.extui %62 : vector<2x128xi1> to vector<2x128xi32>
    %64 = arith.sitofp %63 : vector<2x128xi32> to vector<2x128xf32>
    %c8 = arith.constant 8 : index
    %c0_19 = arith.constant 0 : index
    %c0_20 = arith.constant 0 : index
    %65 = vector.load %arg2[%c8, %c0_19, %c0_20] : memref<23x2x128xf32, #tpu.memory_space<vmem>>, vector<1x2x128xf32>
    %66 = vector.shape_cast %65 : vector<1x2x128xf32> to vector<2x128xf32>
    %67 = vector.shape_cast %64 : vector<2x128xf32> to vector<1x2x128xf32>
    tpu.vector_store %arg2[%c8, %c0_19, %c0_20], %67 {strides = array<i32>} : memref<23x2x128xf32, #tpu.memory_space<vmem>>, vector<1x2x128xf32>,
    %c9_i32 = arith.constant 9 : i32
    %68 = vector.broadcast %c9_i32 : i32 to vector<2x128xi32>
    %69 = arith.cmpi eq, %4, %68 : vector<2x128xi32>
    %70 = arith.extui %69 : vector<2x128xi1> to vector<2x128xi32>
    %71 = arith.sitofp %70 : vector<2x128xi32> to vector<2x128xf32>
    %c9 = arith.constant 9 : index
    %c0_21 = arith.constant 0 : index
    %c0_22 = arith.constant 0 : index
    %72 = vector.load %arg2[%c9, %c0_21, %c0_22] : memref<23x2x128xf32, #tpu.memory_space<vmem>>, vector<1x2x128xf32>
    %73 = vector.shape_cast %72 : vector<1x2x128xf32> to vector<2x128xf32>
    %74 = vector.shape_cast %71 : vector<2x128xf32> to vector<1x2x128xf32>
    tpu.vector_store %arg2[%c9, %c0_21, %c0_22], %74 {strides = array<i32>} : memref<23x2x128xf32, #tpu.memory_space<vmem>>, vector<1x2x128xf32>,
    %c10_i32 = arith.constant 10 : i32
    %75 = vector.broadcast %c10_i32 : i32 to vector<2x128xi32>
    %76 = arith.cmpi eq, %4, %75 : vector<2x128xi32>
    %77 = arith.extui %76 : vector<2x128xi1> to vector<2x128xi32>
    %78 = arith.sitofp %77 : vector<2x128xi32> to vector<2x128xf32>
    %c10 = arith.constant 10 : index
    %c0_23 = arith.constant 0 : index
    %c0_24 = arith.constant 0 : index
    %79 = vector.load %arg2[%c10, %c0_23, %c0_24] : memref<23x2x128xf32, #tpu.memory_space<vmem>>, vector<1x2x128xf32>
    %80 = vector.shape_cast %79 : vector<1x2x128xf32> to vector<2x128xf32>
    %81 = vector.shape_cast %78 : vector<2x128xf32> to vector<1x2x128xf32>
    tpu.vector_store %arg2[%c10, %c0_23, %c0_24], %81 {strides = array<i32>} : memref<23x2x128xf32, #tpu.memory_space<vmem>>, vector<1x2x128xf32>,
    %c11_i32 = arith.constant 11 : i32
    %82 = vector.broadcast %c11_i32 : i32 to vector<2x128xi32>
    %83 = arith.cmpi eq, %4, %82 : vector<2x128xi32>
    %84 = arith.extui %83 : vector<2x128xi1> to vector<2x128xi32>
    %85 = arith.sitofp %84 : vector<2x128xi32> to vector<2x128xf32>
    %c11 = arith.constant 11 : index
    %c0_25 = arith.constant 0 : index
    %c0_26 = arith.constant 0 : index
    %86 = vector.load %arg2[%c11, %c0_25, %c0_26] : memref<23x2x128xf32, #tpu.memory_space<vmem>>, vector<1x2x128xf32>
    %87 = vector.shape_cast %86 : vector<1x2x128xf32> to vector<2x128xf32>
    %88 = vector.shape_cast %85 : vector<2x128xf32> to vector<1x2x128xf32>
    tpu.vector_store %arg2[%c11, %c0_25, %c0_26], %88 {strides = array<i32>} : memref<23x2x128xf32, #tpu.memory_space<vmem>>, vector<1x2x128xf32>,
    %c12_i32 = arith.constant 12 : i32
    %89 = vector.broadcast %c12_i32 : i32 to vector<2x128xi32>
    %90 = arith.cmpi eq, %4, %89 : vector<2x128xi32>
    %91 = arith.extui %90 : vector<2x128xi1> to vector<2x128xi32>
    %92 = arith.sitofp %91 : vector<2x128xi32> to vector<2x128xf32>
    %c12 = arith.constant 12 : index
    %c0_27 = arith.constant 0 : index
    %c0_28 = arith.constant 0 : index
    %93 = vector.load %arg2[%c12, %c0_27, %c0_28] : memref<23x2x128xf32, #tpu.memory_space<vmem>>, vector<1x2x128xf32>
    %94 = vector.shape_cast %93 : vector<1x2x128xf32> to vector<2x128xf32>
    %95 = vector.shape_cast %92 : vector<2x128xf32> to vector<1x2x128xf32>
    tpu.vector_store %arg2[%c12, %c0_27, %c0_28], %95 {strides = array<i32>} : memref<23x2x128xf32, #tpu.memory_space<vmem>>, vector<1x2x128xf32>,
    %c13_i32 = arith.constant 13 : i32
    %96 = vector.broadcast %c13_i32 : i32 to vector<2x128xi32>
    %97 = arith.cmpi eq, %4, %96 : vector<2x128xi32>
    %98 = arith.extui %97 : vector<2x128xi1> to vector<2x128xi32>
    %99 = arith.sitofp %98 : vector<2x128xi32> to vector<2x128xf32>
    %c13 = arith.constant 13 : index
    %c0_29 = arith.constant 0 : index
    %c0_30 = arith.constant 0 : index
    %100 = vector.load %arg2[%c13, %c0_29, %c0_30] : memref<23x2x128xf32, #tpu.memory_space<vmem>>, vector<1x2x128xf32>
    %101 = vector.shape_cast %100 : vector<1x2x128xf32> to vector<2x128xf32>
    %102 = vector.shape_cast %99 : vector<2x128xf32> to vector<1x2x128xf32>
    tpu.vector_store %arg2[%c13, %c0_29, %c0_30], %102 {strides = array<i32>} : memref<23x2x128xf32, #tpu.memory_space<vmem>>, vector<1x2x128xf32>,
    %c14_i32 = arith.constant 14 : i32
    %103 = vector.broadcast %c14_i32 : i32 to vector<2x128xi32>
    %104 = arith.cmpi eq, %4, %103 : vector<2x128xi32>
    %105 = arith.extui %104 : vector<2x128xi1> to vector<2x128xi32>
    %106 = arith.sitofp %105 : vector<2x128xi32> to vector<2x128xf32>
    %c14 = arith.constant 14 : index
    %c0_31 = arith.constant 0 : index
    %c0_32 = arith.constant 0 : index
    %107 = vector.load %arg2[%c14, %c0_31, %c0_32] : memref<23x2x128xf32, #tpu.memory_space<vmem>>, vector<1x2x128xf32>
    %108 = vector.shape_cast %107 : vector<1x2x128xf32> to vector<2x128xf32>
    %109 = vector.shape_cast %106 : vector<2x128xf32> to vector<1x2x128xf32>
    tpu.vector_store %arg2[%c14, %c0_31, %c0_32], %109 {strides = array<i32>} : memref<23x2x128xf32, #tpu.memory_space<vmem>>, vector<1x2x128xf32>,
    %c15_i32 = arith.constant 15 : i32
    %110 = vector.broadcast %c15_i32 : i32 to vector<2x128xi32>
    %111 = arith.cmpi eq, %4, %110 : vector<2x128xi32>
    %112 = arith.extui %111 : vector<2x128xi1> to vector<2x128xi32>
    %113 = arith.sitofp %112 : vector<2x128xi32> to vector<2x128xf32>
    %c15 = arith.constant 15 : index
    %c0_33 = arith.constant 0 : index
    %c0_34 = arith.constant 0 : index
    %114 = vector.load %arg2[%c15, %c0_33, %c0_34] : memref<23x2x128xf32, #tpu.memory_space<vmem>>, vector<1x2x128xf32>
    %115 = vector.shape_cast %114 : vector<1x2x128xf32> to vector<2x128xf32>
    %116 = vector.shape_cast %113 : vector<2x128xf32> to vector<1x2x128xf32>
    tpu.vector_store %arg2[%c15, %c0_33, %c0_34], %116 {strides = array<i32>} : memref<23x2x128xf32, #tpu.memory_space<vmem>>, vector<1x2x128xf32>,
    %c16_i32 = arith.constant 16 : i32
    %117 = vector.broadcast %c16_i32 : i32 to vector<2x128xi32>
    %118 = arith.cmpi eq, %4, %117 : vector<2x128xi32>
    %119 = arith.extui %118 : vector<2x128xi1> to vector<2x128xi32>
    %120 = arith.sitofp %119 : vector<2x128xi32> to vector<2x128xf32>
    %c16 = arith.constant 16 : index
    %c0_35 = arith.constant 0 : index
    %c0_36 = arith.constant 0 : index
    %121 = vector.load %arg2[%c16, %c0_35, %c0_36] : memref<23x2x128xf32, #tpu.memory_space<vmem>>, vector<1x2x128xf32>
    %122 = vector.shape_cast %121 : vector<1x2x128xf32> to vector<2x128xf32>
    %123 = vector.shape_cast %120 : vector<2x128xf32> to vector<1x2x128xf32>
    tpu.vector_store %arg2[%c16, %c0_35, %c0_36], %123 {strides = array<i32>} : memref<23x2x128xf32, #tpu.memory_space<vmem>>, vector<1x2x128xf32>,
    %c17_i32 = arith.constant 17 : i32
    %124 = vector.broadcast %c17_i32 : i32 to vector<2x128xi32>
    %125 = arith.cmpi eq, %4, %124 : vector<2x128xi32>
    %126 = arith.extui %125 : vector<2x128xi1> to vector<2x128xi32>
    %127 = arith.sitofp %126 : vector<2x128xi32> to vector<2x128xf32>
    %c17 = arith.constant 17 : index
    %c0_37 = arith.constant 0 : index
    %c0_38 = arith.constant 0 : index
    %128 = vector.load %arg2[%c17, %c0_37, %c0_38] : memref<23x2x128xf32, #tpu.memory_space<vmem>>, vector<1x2x128xf32>
    %129 = vector.shape_cast %128 : vector<1x2x128xf32> to vector<2x128xf32>
    %130 = vector.shape_cast %127 : vector<2x128xf32> to vector<1x2x128xf32>
    tpu.vector_store %arg2[%c17, %c0_37, %c0_38], %130 {strides = array<i32>} : memref<23x2x128xf32, #tpu.memory_space<vmem>>, vector<1x2x128xf32>,
    %c18_i32 = arith.constant 18 : i32
    %131 = vector.broadcast %c18_i32 : i32 to vector<2x128xi32>
    %132 = arith.cmpi eq, %4, %131 : vector<2x128xi32>
    %133 = arith.extui %132 : vector<2x128xi1> to vector<2x128xi32>
    %134 = arith.sitofp %133 : vector<2x128xi32> to vector<2x128xf32>
    %c18 = arith.constant 18 : index
    %c0_39 = arith.constant 0 : index
    %c0_40 = arith.constant 0 : index
    %135 = vector.load %arg2[%c18, %c0_39, %c0_40] : memref<23x2x128xf32, #tpu.memory_space<vmem>>, vector<1x2x128xf32>
    %136 = vector.shape_cast %135 : vector<1x2x128xf32> to vector<2x128xf32>
    %137 = vector.shape_cast %134 : vector<2x128xf32> to vector<1x2x128xf32>
    tpu.vector_store %arg2[%c18, %c0_39, %c0_40], %137 {strides = array<i32>} : memref<23x2x128xf32, #tpu.memory_space<vmem>>, vector<1x2x128xf32>,
    %c19_i32 = arith.constant 19 : i32
    %138 = vector.broadcast %c19_i32 : i32 to vector<2x128xi32>
    %139 = arith.cmpi eq, %4, %138 : vector<2x128xi32>
    %140 = arith.extui %139 : vector<2x128xi1> to vector<2x128xi32>
    %141 = arith.sitofp %140 : vector<2x128xi32> to vector<2x128xf32>
    %c19 = arith.constant 19 : index
    %c0_41 = arith.constant 0 : index
    %c0_42 = arith.constant 0 : index
    %142 = vector.load %arg2[%c19, %c0_41, %c0_42] : memref<23x2x128xf32, #tpu.memory_space<vmem>>, vector<1x2x128xf32>
    %143 = vector.shape_cast %142 : vector<1x2x128xf32> to vector<2x128xf32>
    %144 = vector.shape_cast %141 : vector<2x128xf32> to vector<1x2x128xf32>
    tpu.vector_store %arg2[%c19, %c0_41, %c0_42], %144 {strides = array<i32>} : memref<23x2x128xf32, #tpu.memory_space<vmem>>, vector<1x2x128xf32>,
    %c20_i32 = arith.constant 20 : i32
    %145 = vector.broadcast %c20_i32 : i32 to vector<2x128xi32>
    %146 = arith.cmpi eq, %4, %145 : vector<2x128xi32>
    %147 = arith.extui %146 : vector<2x128xi1> to vector<2x128xi32>
    %148 = arith.sitofp %147 : vector<2x128xi32> to vector<2x128xf32>
    %c20 = arith.constant 20 : index
    %c0_43 = arith.constant 0 : index
    %c0_44 = arith.constant 0 : index
    %149 = vector.load %arg2[%c20, %c0_43, %c0_44] : memref<23x2x128xf32, #tpu.memory_space<vmem>>, vector<1x2x128xf32>
    %150 = vector.shape_cast %149 : vector<1x2x128xf32> to vector<2x128xf32>
    %151 = vector.shape_cast %148 : vector<2x128xf32> to vector<1x2x128xf32>
    tpu.vector_store %arg2[%c20, %c0_43, %c0_44], %151 {strides = array<i32>} : memref<23x2x128xf32, #tpu.memory_space<vmem>>, vector<1x2x128xf32>,
    %c21_i32 = arith.constant 21 : i32
    %152 = vector.broadcast %c21_i32 : i32 to vector<2x128xi32>
    %153 = arith.cmpi eq, %4, %152 : vector<2x128xi32>
    %154 = arith.extui %153 : vector<2x128xi1> to vector<2x128xi32>
    %155 = arith.sitofp %154 : vector<2x128xi32> to vector<2x128xf32>
    %c21 = arith.constant 21 : index
    %c0_45 = arith.constant 0 : index
    %c0_46 = arith.constant 0 : index
    %156 = vector.load %arg2[%c21, %c0_45, %c0_46] : memref<23x2x128xf32, #tpu.memory_space<vmem>>, vector<1x2x128xf32>
    %157 = vector.shape_cast %156 : vector<1x2x128xf32> to vector<2x128xf32>
    %158 = vector.shape_cast %155 : vector<2x128xf32> to vector<1x2x128xf32>
    tpu.vector_store %arg2[%c21, %c0_45, %c0_46], %158 {strides = array<i32>} : memref<23x2x128xf32, #tpu.memory_space<vmem>>, vector<1x2x128xf32>,
    %c22_i32 = arith.constant 22 : i32
    %159 = vector.broadcast %c22_i32 : i32 to vector<2x128xi32>
    %160 = arith.cmpi eq, %4, %159 : vector<2x128xi32>
    %161 = arith.extui %160 : vector<2x128xi1> to vector<2x128xi32>
    %162 = arith.sitofp %161 : vector<2x128xi32> to vector<2x128xf32>
    %c22 = arith.constant 22 : index
    %c0_47 = arith.constant 0 : index
    %c0_48 = arith.constant 0 : index
    %163 = vector.load %arg2[%c22, %c0_47, %c0_48] : memref<23x2x128xf32, #tpu.memory_space<vmem>>, vector<1x2x128xf32>
    %164 = vector.shape_cast %163 : vector<1x2x128xf32> to vector<2x128xf32>
    %165 = vector.shape_cast %162 : vector<2x128xf32> to vector<1x2x128xf32>
    tpu.vector_store %arg2[%c22, %c0_47, %c0_48], %165 {strides = array<i32>} : memref<23x2x128xf32, #tpu.memory_space<vmem>>, vector<1x2x128xf32>,
    return
  }
  func.func @transform_0(%arg0: i32) -> (i32, i32) {
    %c0_i32 = arith.constant 0 : i32
    %c0_i32_0 = arith.constant 0 : i32
    return %arg0, %c0_i32 : i32, i32
  }
  func.func @transform_1(%arg0: i32) -> (i32, i32, i32) {
    %c0_i32 = arith.constant 0 : i32
    %c0_i32_0 = arith.constant 0 : i32
    %c0_i32_1 = arith.constant 0 : i32
    return %c0_i32, %arg0, %c0_i32_0 : i32, i32, i32
  }
}

</mosaic_0001>

<llo_original>
// kernel: _build_prediction.1
$region0: #{_build_prediction.1}
  #allocation0 [shape = 'u32[]', space=smem, size = 0x4, offset = 0x4, fixed_abs, tag = 'smem constant byte address 0x4 - core index']
  #allocation1 [shape = 'u32[144,128]{1,0:T(1,128)}', space=vmem, size = 0x12000, scoped, tag = 'internal scratch']
  %s0 = inlined_call_operand.vmem [shape: s32[2,128], index: 0, kind: input, shape index: {}]
  %s1 = inlined_call_operand.vmem [shape: f32[23,2,128], index: 1, kind: output, shape index: {}]
  %s2 = sld [smem:[#allocation0]]
  $region14: #{_build_prediction.1} parent=0
    _
  %s4 = ssub.s32 1, %s2
  %s5 = scalar_select 0, %s4, %s2
  // Predicated region
  $region2: #{_build_prediction.1} parent=0 // pred_check
    _
  $region3: #{_build_prediction.1} parent=0 // pred_check_branch
    %7 = sbr.rel (0) target = $region5
  $region4: #{_build_prediction.1} parent=0 // pred_region
    _
  $region5: #{_build_prediction.1} parent=0 // pred_fallthru
    _
  %v8 = vld [vmem:[%s0] sm:$0x3]
  %vm9 = vcmp.eq.s32.totalorder %v8, 4294967295
  %v10 = vsel %vm9, 1, %v8
  %vm11 = vcmp.eq.s32.totalorder %v10, 0
  %v12 = vsel %vm11, 1, 0
  %v13 = vcvt.s32.f32 %v12
  %14 = vst [vmem:[%s1] sm:$0x3] %v13
  %vm15 = vcmp.eq.s32.totalorder %v10, 1
  %v16 = vsel %vm15, 1, 0
  %v17 = vcvt.s32.f32 %v16
  %s18 = scalar_lea.vmem %s1, 2
  %19 = vst [vmem:[%s18] sm:$0x3] %v17
  %vm20 = vcmp.eq.s32.totalorder %v10, 2
  %v21 = vsel %vm20, 1, 0
  %v22 = vcvt.s32.f32 %v21
  %s23 = scalar_lea.vmem %s1, 4
  %24 = vst [vmem:[%s23] sm:$0x3] %v22
  %vm25 = vcmp.eq.s32.totalorder %v10, 3
  %v26 = vsel %vm25, 1, 0
  %v27 = vcvt.s32.f32 %v26
  %s28 = scalar_lea.vmem %s1, 6
  %29 = vst [vmem:[%s28] sm:$0x3] %v27
  %vm30 = vcmp.eq.s32.totalorder %v10, 4
  %v31 = vsel %vm30, 1, 0
  %v32 = vcvt.s32.f32 %v31
  %s33 = scalar_lea.vmem %s1, 8
  %34 = vst [vmem:[%s33] sm:$0x3] %v32
  %vm35 = vcmp.eq.s32.totalorder %v10, 5
  %v36 = vsel %vm35, 1, 0
  %v37 = vcvt.s32.f32 %v36
  %s38 = scalar_lea.vmem %s1, 10
  %39 = vst [vmem:[%s38] sm:$0x3] %v37
  %vm40 = vcmp.eq.s32.totalorder %v10, 6
  %v41 = vsel %vm40, 1, 0
  %v42 = vcvt.s32.f32 %v41
  %s43 = scalar_lea.vmem %s1, 12
  %44 = vst [vmem:[%s43] sm:$0x3] %v42
  %vm45 = vcmp.eq.s32.totalorder %v10, 7
  %v46 = vsel %vm45, 1, 0
  %v47 = vcvt.s32.f32 %v46
  %s48 = scalar_lea.vmem %s1, 14
  %49 = vst [vmem:[%s48] sm:$0x3] %v47
  %vm50 = vcmp.eq.s32.totalorder %v10, 8
  %v51 = vsel %vm50, 1, 0
  %v52 = vcvt.s32.f32 %v51
  %s53 = scalar_lea.vmem %s1, 16
  %54 = vst [vmem:[%s53] sm:$0x3] %v52
  %vm55 = vcmp.eq.s32.totalorder %v10, 9
  %v56 = vsel %vm55, 1, 0
  %v57 = vcvt.s32.f32 %v56
  %s58 = scalar_lea.vmem %s1, 18
  %59 = vst [vmem:[%s58] sm:$0x3] %v57
  %vm60 = vcmp.eq.s32.totalorder %v10, 10
  %v61 = vsel %vm60, 1, 0
  %v62 = vcvt.s32.f32 %v61
  %s63 = scalar_lea.vmem %s1, 20
  %64 = vst [vmem:[%s63] sm:$0x3] %v62
  %vm65 = vcmp.eq.s32.totalorder %v10, 11
  %v66 = vsel %vm65, 1, 0
  %v67 = vcvt.s32.f32 %v66
  %s68 = scalar_lea.vmem %s1, 22
  %69 = vst [vmem:[%s68] sm:$0x3] %v67
  %vm70 = vcmp.eq.s32.totalorder %v10, 12
  %v71 = vsel %vm70, 1, 0
  %v72 = vcvt.s32.f32 %v71
  %s73 = scalar_lea.vmem %s1, 24
  %74 = vst [vmem:[%s73] sm:$0x3] %v72
  %vm75 = vcmp.eq.s32.totalorder %v10, 13
  %v76 = vsel %vm75, 1, 0
  %v77 = vcvt.s32.f32 %v76
  %s78 = scalar_lea.vmem %s1, 26
  %79 = vst [vmem:[%s78] sm:$0x3] %v77
  %vm80 = vcmp.eq.s32.totalorder %v10, 14
  %v81 = vsel %vm80, 1, 0
  %v82 = vcvt.s32.f32 %v81
  %s83 = scalar_lea.vmem %s1, 28
  %84 = vst [vmem:[%s83] sm:$0x3] %v82
  %vm85 = vcmp.eq.s32.totalorder %v10, 15
  %v86 = vsel %vm85, 1, 0
  %v87 = vcvt.s32.f32 %v86
  %s88 = scalar_lea.vmem %s1, 30
  %89 = vst [vmem:[%s88] sm:$0x3] %v87
  %vm90 = vcmp.eq.s32.totalorder %v10, 16
  %v91 = vsel %vm90, 1, 0
  %v92 = vcvt.s32.f32 %v91
  %s93 = scalar_lea.vmem %s1, 32
  %94 = vst [vmem:[%s93] sm:$0x3] %v92
  %vm95 = vcmp.eq.s32.totalorder %v10, 17
  %v96 = vsel %vm95, 1, 0
  %v97 = vcvt.s32.f32 %v96
  %s98 = scalar_lea.vmem %s1, 34
  %99 = vst [vmem:[%s98] sm:$0x3] %v97
  %vm100 = vcmp.eq.s32.totalorder %v10, 18
  %v101 = vsel %vm100, 1, 0
  %v102 = vcvt.s32.f32 %v101
  %s103 = scalar_lea.vmem %s1, 36
  %104 = vst [vmem:[%s103] sm:$0x3] %v102
  %vm105 = vcmp.eq.s32.totalorder %v10, 19
  %v106 = vsel %vm105, 1, 0
  %v107 = vcvt.s32.f32 %v106
  %s108 = scalar_lea.vmem %s1, 38
  %109 = vst [vmem:[%s108] sm:$0x3] %v107
  %vm110 = vcmp.eq.s32.totalorder %v10, 20
  %v111 = vsel %vm110, 1, 0
  %v112 = vcvt.s32.f32 %v111
  %s113 = scalar_lea.vmem %s1, 40
  %114 = vst [vmem:[%s113] sm:$0x3] %v112
  %vm115 = vcmp.eq.s32.totalorder %v10, 21
  %v116 = vsel %vm115, 1, 0
  %v117 = vcvt.s32.f32 %v116
  %s118 = scalar_lea.vmem %s1, 42
  %119 = vst [vmem:[%s118] sm:$0x3] %v117
  %vm120 = vcmp.eq.s32.totalorder %v10, 22
  %v121 = vsel %vm120, 1, 0
  %v122 = vcvt.s32.f32 %v121
  %s123 = scalar_lea.vmem %s1, 44
  %124 = vst [vmem:[%s123] sm:$0x3] %v122
  // Predicated region
  $region6: #{_build_prediction.1} parent=0 // pred_check
    _
  $region7: #{_build_prediction.1} parent=0 // pred_check_branch
    %126 = sbr.rel (0) target = $region9
  $region8: #{_build_prediction.1} parent=0 // pred_region
    _
  $region9: #{_build_prediction.1} parent=0 // pred_fallthru
    _
  // Predicated region
  $region10: #{_build_prediction.1} parent=0 // pred_check
    _
  $region11: #{_build_prediction.1} parent=0 // pred_check_branch
    %128 = sbr.rel (0) target = $region13
  $region12: #{_build_prediction.1} parent=0 // pred_region
    _
  $region13: #{_build_prediction.1} parent=0 // pred_fallthru
    _

</llo_original>
